<compile_context>
chip_gen: v5e
topology: v5e:2x2
jax: 0.10.0
libtpu: 0.0.40
codegen_flags: <defaults>
</compile_context>

<pallas_src>
import functools

import jax
import jax.numpy as jnp
from jax.experimental import pallas as pl
from jax.experimental.pallas import tpu as pltpu

EPS = 1e-5


def _pick_cout_tile(c_out, max_tile=256):
    """Largest multiple-of-8 tile <= max_tile dividing c_out, else c_out (full)."""
    if c_out <= max_tile:
        return c_out
    for cand in range(max_tile, 7, -8):
        if c_out % cand == 0:
            return cand
    return c_out                       # full-dim block is always legal


def _vmem_limit(block_bytes, headroom=6 << 20):
    need = 2 * block_bytes + headroom  # double-buffered blocks + scratch slack
    return int(max(16 << 20, min(need, 64 << 20)))   # <=64 MiB: safe on v7x too


def _conv_f32(w_ref, x_ref, *, n_taps, l_out):
    """(co_t, l_out) f32 conv tile: K shifted MXU dots, bf16 in / f32 accumulate."""
    xw = x_ref[0]                                            # (c_in, l_out + K - 1)
    acc = jnp.dot(w_ref[0], xw[:, :l_out], preferred_element_type=jnp.float32)
    for kk in range(1, n_taps):                              # K is small & static
        acc = acc + jnp.dot(w_ref[kk], xw[:, kk:kk + l_out],
                            preferred_element_type=jnp.float32)
    return acc


# ---------------------------------------------------------------------------
# Pass 1: conv on the MXU, emit only per-(sample, channel) [sum, centered M2].
# ---------------------------------------------------------------------------
def _conv_stats_kernel(w_ref, x_ref, stats_ref, *, n_taps, l_out):
    acc = _conv_f32(w_ref, x_ref, n_taps=n_taps, l_out=l_out)
    s = jnp.sum(acc, axis=1, keepdims=True)                  # (co_t, 1) sum
    d = acc - s * (1.0 / l_out)                              # center before squaring
    m2 = jnp.sum(d * d, axis=1, keepdims=True)               # (co_t, 1) centered M2
    stats_ref[0] = jnp.concatenate([s, m2], axis=1)          # single (co_t, 2) store


# ---------------------------------------------------------------------------
# Pass 2: recompute conv, apply folded BN scale/shift + ReLU, store unpadded.
# ---------------------------------------------------------------------------
def _conv_bn_relu_kernel(w_ref, scale_ref, shift_ref, x_ref, out_ref, *,
                         n_taps, l_out, activation):
    acc = _conv_f32(w_ref, x_ref, n_taps=n_taps, l_out=l_out)
    y = acc * scale_ref[...] + shift_ref[...]                # f32 BN math
    if activation:
        y = jnp.maximum(y, 0.0)
    out_ref[0] = y.astype(out_ref.dtype)                     # direct (co_t, l_out) store


def basic_conv2d_forward(x, weight, gamma, beta, *, padding=1, activation=True,
                         eps=EPS, mxu_dtype=jnp.bfloat16):
    """x: (N, C_in, L) f32; weight: (C_out, C_in, K) f32; gamma/beta: (C_out,) f32.

    Returns (N, C_out, L_out) f32 = ReLU(BatchNorm1d(Conv1d(x, weight, bias=False)))
    with BatchNorm in training mode (biased batch statistics over N and L_out).
    """
    n, c_in, l = x.shape
    c_out, _, k = weight.shape
    l_out = l + 2 * padding - k + 1
    if l_out < 1:
        raise ValueError(f"degenerate output length: {l_out}")
    l_in = l_out + k - 1                        # = l + 2 * padding

    co_t = _pick_cout_tile(c_out)
    n_co = c_out // co_t

    # Single cheap zero-pad for the conv halo (no lane padding, no im2col).
    # TODO(synk): fold this pad+cast pre-op into pass 1 via a zero-filled VMEM halo.
    x_pad = jnp.pad(x, ((0, 0), (0, 0), (padding, padding))).astype(mxu_dtype)
    w_k = jnp.transpose(weight, (2, 0, 1)).astype(mxu_dtype)   # (K, C_out, C_in)

    cparams1 = pltpu.CompilerParams(
        dimension_semantics=("parallel", "parallel"),
        vmem_limit_bytes=_vmem_limit(
            k * co_t * c_in * 2 + c_in * l_in * 2 + co_t * 2 * 4
            + 2 * co_t * l_out * 4))
    stats_cost = pl.CostEstimate(
        flops=2 * n * c_out * c_in * k * l_out, transcendentals=0,
        bytes_accessed=x_pad.size * 2 + n_co * w_k.size * 2 + n * c_out * 2 * 4)

    stats = pl.pallas_call(
        functools.partial(_conv_stats_kernel, n_taps=k, l_out=l_out),
        out_shape=jax.ShapeDtypeStruct((n, c_out, 2), jnp.float32),
        grid=(n, n_co),
        in_specs=[
            pl.BlockSpec((k, co_t, c_in), lambda i, j: (0, j, 0)),   # weights
            pl.BlockSpec((1, c_in, l_in), lambda i, j: (i, 0, 0)),   # one sample row
        ],
        out_specs=pl.BlockSpec((1, co_t, 2), lambda i, j: (i, j, 0)),
        compiler_params=cparams1,
        cost_estimate=stats_cost,
    )(w_k, x_pad)

    # Glue: merge per-sample partials Welford-style, fold mean/var/gamma/beta
    # into a per-channel scale & shift.
    cnt_s = jnp.float32(l_out)
    cnt = jnp.float32(n * l_out)
    sums, m2s = stats[:, :, 0], stats[:, :, 1]               # (N, C_out) each
    mean = jnp.sum(sums, axis=0) / cnt                       # (C_out,)
    m2 = jnp.sum(m2s, axis=0) + cnt_s * jnp.sum((sums / cnt_s - mean) ** 2, axis=0)
    var = m2 / cnt                                           # biased (training) var
    scale = gamma.astype(jnp.float32) * jax.lax.rsqrt(var + eps)
    shift = beta.astype(jnp.float32) - mean * scale

    cparams2 = pltpu.CompilerParams(
        dimension_semantics=("parallel", "parallel"),
        vmem_limit_bytes=_vmem_limit(
            k * co_t * c_in * 2 + c_in * l_in * 2 + 2 * co_t * 4
            + 3 * co_t * l_out * 4))
    bn_cost = pl.CostEstimate(
        flops=2 * n * c_out * c_in * k * l_out + 3 * n * c_out * l_out,
        transcendentals=0,
        bytes_accessed=x_pad.size * 2 + n_co * w_k.size * 2
        + 2 * c_out * 4 + n * c_out * l_out * 4)

    out = pl.pallas_call(
        functools.partial(_conv_bn_relu_kernel, n_taps=k, l_out=l_out,
                          activation=activation),
        out_shape=jax.ShapeDtypeStruct((n, c_out, l_out), jnp.float32),
        grid=(n, n_co),
        in_specs=[
            pl.BlockSpec((k, co_t, c_in), lambda i, j: (0, j, 0)),
            pl.BlockSpec((co_t, 1), lambda i, j: (j, 0)),            # scale
            pl.BlockSpec((co_t, 1), lambda i, j: (j, 0)),            # shift
            pl.BlockSpec((1, c_in, l_in), lambda i, j: (i, 0, 0)),
        ],
        out_specs=pl.BlockSpec((1, co_t, l_out), lambda i, j: (i, j, 0)),
        compiler_params=cparams2,
        cost_estimate=bn_cost,
    )(w_k, scale.reshape(c_out, 1), shift.reshape(c_out, 1), x_pad)
    return out


def _reference(x, weight, gamma, beta, *, padding=1, eps=EPS, activation=True):
    """Pure-JAX reference: Conv1d(bias=False) + BatchNorm1d(train) + ReLU."""
    conv = jax.lax.conv_general_dilated(
        x, weight, window_strides=(1,), padding=[(padding, padding)],
        dimension_numbers=("NCH", "OIH", "NCH"),
        precision=jax.lax.Precision.HIGHEST)
    mean = conv.mean(axis=(0, 2), keepdims=True)
    var = ((conv - mean) ** 2).mean(axis=(0, 2), keepdims=True)
    y = (conv - mean) * jax.lax.rsqrt(var + eps)
    y = y * gamma.reshape(1, -1, 1) + beta.reshape(1, -1, 1)
    return jnp.maximum(y, 0.0) if activation else y


if __name__ == "__main__":
    key = jax.random.PRNGKey(0)
    k_x, k_w, k_g, k_b = jax.random.split(key, 4)

    N, C_in, C_out, L, K, PAD = 2, 4, 8, 16, 3, 1

    x = jax.random.normal(k_x, (N, C_in, L), dtype=jnp.float32)
    fan_in = C_in * K
    weight = jax.random.normal(k_w, (C_out, C_in, K), dtype=jnp.float32) / jnp.sqrt(fan_in)
    gamma = 1.0 + 0.1 * jax.random.normal(k_g, (C_out,), dtype=jnp.float32)
    beta = 0.1 * jax.random.normal(k_b, (C_out,), dtype=jnp.float32)

    fwd = jax.jit(functools.partial(basic_conv2d_forward, padding=PAD, activation=True))
    out = jax.block_until_ready(fwd(x, weight, gamma, beta))

    # Reference uses the same bf16-quantized MXU operands (intentional precision
    # choice); accumulation and all BatchNorm math are f32 in both.
    x_q = x.astype(jnp.bfloat16).astype(jnp.float32)
    w_q = weight.astype(jnp.bfloat16).astype(jnp.float32)
    ref = _reference(x_q, w_q, gamma, beta, padding=PAD, activation=True)

    L_out = L + 2 * PAD - K + 1
    assert out.shape == (N, C_out, L_out), out.shape
    assert jnp.allclose(out, ref, atol=2e-4, rtol=2e-4), "mismatch vs reference"

    print("KERNEL_OK")
</pallas_src>

<mosaic_0001>
module attributes {stable_mosaic.version = 11 : i64} {
  func.func @_conv_stats_kernel(%arg0: i32, %arg1: i32, %arg2: memref<3x8x4xbf16, #tpu.memory_space<vmem>>, %arg3: memref<1x4x18xbf16, #tpu.memory_space<vmem>>, %arg4: memref<1x8x2xf32, #tpu.memory_space<vmem>>) attributes {dimension_semantics = [#tpu.dimension_semantics<parallel>, #tpu.dimension_semantics<parallel>], iteration_bounds = array<i64: 2, 1>, scalar_prefetch = 0 : i64, scratch_operands = 0 : i64, tpu.core_type = #tpu.core_type<tc>, window_params = [{transform_indices = @transform_0, window_bounds = array<i64: 3, 8, 4>}, {transform_indices = @transform_1, window_bounds = array<i64: 1, 4, 18>}, {transform_indices = @transform_2, window_bounds = array<i64: 1, 8, 2>}]} {
    %c0 = arith.constant 0 : index
    %c0_0 = arith.constant 0 : index
    %c0_1 = arith.constant 0 : index
    %0 = vector.load %arg3[%c0, %c0_0, %c0_1] : memref<1x4x18xbf16, #tpu.memory_space<vmem>>, vector<1x4x18xbf16>
    %1 = vector.shape_cast %0 : vector<1x4x18xbf16> to vector<4x18xbf16>
    %c0_2 = arith.constant 0 : index
    %c0_3 = arith.constant 0 : index
    %c0_4 = arith.constant 0 : index
    %2 = vector.load %arg2[%c0_2, %c0_3, %c0_4] : memref<3x8x4xbf16, #tpu.memory_space<vmem>>, vector<1x8x4xbf16>
    %3 = vector.shape_cast %2 : vector<1x8x4xbf16> to vector<8x4xbf16>
    %4 = vector.extract_strided_slice %1 {offsets = [0, 0], sizes = [4, 16], strides = [1, 1]} : vector<4x18xbf16> to vector<4x16xbf16>
    %cst = arith.constant dense<0.000000e+00> : vector<8x16xf32>
    %5 = tpu.matmul %3, %4, %cst {dimension_numbers = #tpu.dot_dimension_numbers<[1], [0], [0], [1], [0, 0, 1, 1], [], []>} : vector<8x4xbf16>, vector<4x16xbf16>, vector<8x16xf32> -> vector<8x16xf32>
    %c1 = arith.constant 1 : index
    %c0_5 = arith.constant 0 : index
    %c0_6 = arith.constant 0 : index
    %6 = vector.load %arg2[%c1, %c0_5, %c0_6] : memref<3x8x4xbf16, #tpu.memory_space<vmem>>, vector<1x8x4xbf16>
    %7 = vector.shape_cast %6 : vector<1x8x4xbf16> to vector<8x4xbf16>
    %8 = vector.extract_strided_slice %1 {offsets = [0, 1], sizes = [4, 16], strides = [1, 1]} : vector<4x18xbf16> to vector<4x16xbf16>
    %cst_7 = arith.constant dense<0.000000e+00> : vector<8x16xf32>
    %9 = tpu.matmul %7, %8, %cst_7 {dimension_numbers = #tpu.dot_dimension_numbers<[1], [0], [0], [1], [0, 0, 1, 1], [], []>} : vector<8x4xbf16>, vector<4x16xbf16>, vector<8x16xf32> -> vector<8x16xf32>
    %10 = arith.addf %5, %9 : vector<8x16xf32>
    %c2 = arith.constant 2 : index
    %c0_8 = arith.constant 0 : index
    %c0_9 = arith.constant 0 : index
    %11 = vector.load %arg2[%c2, %c0_8, %c0_9] : memref<3x8x4xbf16, #tpu.memory_space<vmem>>, vector<1x8x4xbf16>
    %12 = vector.shape_cast %11 : vector<1x8x4xbf16> to vector<8x4xbf16>
    %13 = vector.extract_strided_slice %1 {offsets = [0, 2], sizes = [4, 16], strides = [1, 1]} : vector<4x18xbf16> to vector<4x16xbf16>
    %cst_10 = arith.constant dense<0.000000e+00> : vector<8x16xf32>
    %14 = tpu.matmul %12, %13, %cst_10 {dimension_numbers = #tpu.dot_dimension_numbers<[1], [0], [0], [1], [0, 0, 1, 1], [], []>} : vector<8x4xbf16>, vector<4x16xbf16>, vector<8x16xf32> -> vector<8x16xf32>
    %15 = arith.addf %10, %14 : vector<8x16xf32>
    %cst_11 = arith.constant dense<0.000000e+00> : vector<8xf32>
    %16 = vector.multi_reduction <add>, %15, %cst_11 [1] : vector<8x16xf32> to vector<8xf32>
    %17 = vector.shape_cast %16 : vector<8xf32> to vector<8x1xf32>
    %cst_12 = arith.constant 6.250000e-02 : f32
    %18 = vector.broadcast %cst_12 : f32 to vector<8x1xf32>
    %19 = arith.mulf %17, %18 : vector<8x1xf32>
    %20 = vector.broadcast %19 : vector<8x1xf32> to vector<8x16xf32>
    %21 = arith.subf %15, %20 : vector<8x16xf32>
    %22 = arith.mulf %21, %21 : vector<8x16xf32>
    %cst_13 = arith.constant dense<0.000000e+00> : vector<8xf32>
    %23 = vector.multi_reduction <add>, %22, %cst_13 [1] : vector<8x16xf32> to vector<8xf32>
    %24 = vector.shape_cast %23 : vector<8xf32> to vector<8x1xf32>
    %25 = tpu.concatenate %17, %24 in 1 : vector<8x1xf32>, vector<8x1xf32> -> vector<8x2xf32>
    %c0_14 = arith.constant 0 : index
    %c0_15 = arith.constant 0 : index
    %c0_16 = arith.constant 0 : index
    %26 = vector.load %arg4[%c0_14, %c0_15, %c0_16] : memref<1x8x2xf32, #tpu.memory_space<vmem>>, vector<1x8x2xf32>
    %27 = vector.shape_cast %26 : vector<1x8x2xf32> to vector<8x2xf32>
    %28 = vector.shape_cast %25 : vector<8x2xf32> to vector<1x8x2xf32>
    tpu.vector_store %arg4[%c0_14, %c0_15, %c0_16], %28 {strides = array<i32>} : memref<1x8x2xf32, #tpu.memory_space<vmem>>, vector<1x8x2xf32>,
    return
  }
  func.func @transform_0(%arg0: i32, %arg1: i32) -> (i32, i32, i32) {
    %c0_i32 = arith.constant 0 : i32
    %c0_i32_0 = arith.constant 0 : i32
    %c0_i32_1 = arith.constant 0 : i32
    return %c0_i32, %arg1, %c0_i32_0 : i32, i32, i32
  }
  func.func @transform_1(%arg0: i32, %arg1: i32) -> (i32, i32, i32) {
    %c0_i32 = arith.constant 0 : i32
    %c0_i32_0 = arith.constant 0 : i32
    %c0_i32_1 = arith.constant 0 : i32
    return %arg0, %c0_i32, %c0_i32_0 : i32, i32, i32
  }
  func.func @transform_2(%arg0: i32, %arg1: i32) -> (i32, i32, i32) {
    %c0_i32 = arith.constant 0 : i32
    %c0_i32_0 = arith.constant 0 : i32
    return %arg0, %arg1, %c0_i32 : i32, i32, i32
  }
}

module attributes {stable_mosaic.version = 11 : i64} {
  func.func @_conv_bn_relu_kernel(%arg0: i32, %arg1: i32, %arg2: memref<3x8x4xbf16, #tpu.memory_space<vmem>>, %arg3: memref<8x1xf32, #tpu.memory_space<vmem>>, %arg4: memref<8x1xf32, #tpu.memory_space<vmem>>, %arg5: memref<1x4x18xbf16, #tpu.memory_space<vmem>>, %arg6: memref<1x8x16xf32, #tpu.memory_space<vmem>>) attributes {dimension_semantics = [#tpu.dimension_semantics<parallel>, #tpu.dimension_semantics<parallel>], iteration_bounds = array<i64: 2, 1>, scalar_prefetch = 0 : i64, scratch_operands = 0 : i64, tpu.core_type = #tpu.core_type<tc>, window_params = [{transform_indices = @transform_0, window_bounds = array<i64: 3, 8, 4>}, {transform_indices = @transform_1, window_bounds = array<i64: 8, 1>}, {transform_indices = @transform_2, window_bounds = array<i64: 8, 1>}, {transform_indices = @transform_3, window_bounds = array<i64: 1, 4, 18>}, {transform_indices = @transform_4, window_bounds = array<i64: 1, 8, 16>}]} {
    %c0 = arith.constant 0 : index
    %c0_0 = arith.constant 0 : index
    %c0_1 = arith.constant 0 : index
    %0 = vector.load %arg5[%c0, %c0_0, %c0_1] : memref<1x4x18xbf16, #tpu.memory_space<vmem>>, vector<1x4x18xbf16>
    %1 = vector.shape_cast %0 : vector<1x4x18xbf16> to vector<4x18xbf16>
    %c0_2 = arith.constant 0 : index
    %c0_3 = arith.constant 0 : index
    %c0_4 = arith.constant 0 : index
    %2 = vector.load %arg2[%c0_2, %c0_3, %c0_4] : memref<3x8x4xbf16, #tpu.memory_space<vmem>>, vector<1x8x4xbf16>
    %3 = vector.shape_cast %2 : vector<1x8x4xbf16> to vector<8x4xbf16>
    %4 = vector.extract_strided_slice %1 {offsets = [0, 0], sizes = [4, 16], strides = [1, 1]} : vector<4x18xbf16> to vector<4x16xbf16>
    %cst = arith.constant dense<0.000000e+00> : vector<8x16xf32>
    %5 = tpu.matmul %3, %4, %cst {dimension_numbers = #tpu.dot_dimension_numbers<[1], [0], [0], [1], [0, 0, 1, 1], [], []>} : vector<8x4xbf16>, vector<4x16xbf16>, vector<8x16xf32> -> vector<8x16xf32>
    %c1 = arith.constant 1 : index
    %c0_5 = arith.constant 0 : index
    %c0_6 = arith.constant 0 : index
    %6 = vector.load %arg2[%c1, %c0_5, %c0_6] : memref<3x8x4xbf16, #tpu.memory_space<vmem>>, vector<1x8x4xbf16>
    %7 = vector.shape_cast %6 : vector<1x8x4xbf16> to vector<8x4xbf16>
    %8 = vector.extract_strided_slice %1 {offsets = [0, 1], sizes = [4, 16], strides = [1, 1]} : vector<4x18xbf16> to vector<4x16xbf16>
    %cst_7 = arith.constant dense<0.000000e+00> : vector<8x16xf32>
    %9 = tpu.matmul %7, %8, %cst_7 {dimension_numbers = #tpu.dot_dimension_numbers<[1], [0], [0], [1], [0, 0, 1, 1], [], []>} : vector<8x4xbf16>, vector<4x16xbf16>, vector<8x16xf32> -> vector<8x16xf32>
    %10 = arith.addf %5, %9 : vector<8x16xf32>
    %c2 = arith.constant 2 : index
    %c0_8 = arith.constant 0 : index
    %c0_9 = arith.constant 0 : index
    %11 = vector.load %arg2[%c2, %c0_8, %c0_9] : memref<3x8x4xbf16, #tpu.memory_space<vmem>>, vector<1x8x4xbf16>
    %12 = vector.shape_cast %11 : vector<1x8x4xbf16> to vector<8x4xbf16>
    %13 = vector.extract_strided_slice %1 {offsets = [0, 2], sizes = [4, 16], strides = [1, 1]} : vector<4x18xbf16> to vector<4x16xbf16>
    %cst_10 = arith.constant dense<0.000000e+00> : vector<8x16xf32>
    %14 = tpu.matmul %12, %13, %cst_10 {dimension_numbers = #tpu.dot_dimension_numbers<[1], [0], [0], [1], [0, 0, 1, 1], [], []>} : vector<8x4xbf16>, vector<4x16xbf16>, vector<8x16xf32> -> vector<8x16xf32>
    %15 = arith.addf %10, %14 : vector<8x16xf32>
    %c0_11 = arith.constant 0 : index
    %c0_12 = arith.constant 0 : index
    %16 = vector.load %arg3[%c0_11, %c0_12] : memref<8x1xf32, #tpu.memory_space<vmem>>, vector<8x1xf32>
    %17 = vector.broadcast %16 : vector<8x1xf32> to vector<8x16xf32>
    %18 = arith.mulf %15, %17 : vector<8x16xf32>
    %c0_13 = arith.constant 0 : index
    %c0_14 = arith.constant 0 : index
    %19 = vector.load %arg4[%c0_13, %c0_14] : memref<8x1xf32, #tpu.memory_space<vmem>>, vector<8x1xf32>
    %20 = vector.broadcast %19 : vector<8x1xf32> to vector<8x16xf32>
    %21 = arith.addf %18, %20 : vector<8x16xf32>
    %cst_15 = arith.constant 0.000000e+00 : f32
    %22 = vector.broadcast %cst_15 : f32 to vector<8x16xf32>
    %23 = arith.maximumf %21, %22 : vector<8x16xf32>
    %c0_16 = arith.constant 0 : index
    %c0_17 = arith.constant 0 : index
    %c0_18 = arith.constant 0 : index
    %24 = vector.load %arg6[%c0_16, %c0_17, %c0_18] : memref<1x8x16xf32, #tpu.memory_space<vmem>>, vector<1x8x16xf32>
    %25 = vector.shape_cast %24 : vector<1x8x16xf32> to vector<8x16xf32>
    %26 = vector.shape_cast %23 : vector<8x16xf32> to vector<1x8x16xf32>
    tpu.vector_store %arg6[%c0_16, %c0_17, %c0_18], %26 {strides = array<i32>} : memref<1x8x16xf32, #tpu.memory_space<vmem>>, vector<1x8x16xf32>,
    return
  }
  func.func @transform_0(%arg0: i32, %arg1: i32) -> (i32, i32, i32) {
    %c0_i32 = arith.constant 0 : i32
    %c0_i32_0 = arith.constant 0 : i32
    %c0_i32_1 = arith.constant 0 : i32
    return %c0_i32, %arg1, %c0_i32_0 : i32, i32, i32
  }
  func.func @transform_1(%arg0: i32, %arg1: i32) -> (i32, i32) {
    %c0_i32 = arith.constant 0 : i32
    %c0_i32_0 = arith.constant 0 : i32
    return %arg1, %c0_i32 : i32, i32
  }
  func.func @transform_2(%arg0: i32, %arg1: i32) -> (i32, i32) {
    %c0_i32 = arith.constant 0 : i32
    %c0_i32_0 = arith.constant 0 : i32
    return %arg1, %c0_i32 : i32, i32
  }
  func.func @transform_3(%arg0: i32, %arg1: i32) -> (i32, i32, i32) {
    %c0_i32 = arith.constant 0 : i32
    %c0_i32_0 = arith.constant 0 : i32
    %c0_i32_1 = arith.constant 0 : i32
    return %arg0, %c0_i32, %c0_i32_0 : i32, i32, i32
  }
  func.func @transform_4(%arg0: i32, %arg1: i32) -> (i32, i32, i32) {
    %c0_i32 = arith.constant 0 : i32
    %c0_i32_0 = arith.constant 0 : i32
    return %arg0, %arg1, %c0_i32 : i32, i32, i32
  }
}

</mosaic_0001>

<llo_original>
// kernel: basic_conv2d_forward.3
$region0: #{basic_conv2d_forward.3}
  #allocation0 [shape = 'u32[]', space=smem, size = 0x4, offset = 0x4, fixed_abs, tag = 'smem constant byte address 0x4 - core index']
  #allocation1 [shape = 'u32[72,128]{1,0:T(1,128)}', space=vmem, size = 0x9000, scoped, tag = 'internal scratch']
  %s0 = inlined_call_operand.vmem [shape: bf16[3,8,4], index: 0, kind: input, shape index: {}]
  %s1 = inlined_call_operand.vmem [shape: f32[8,1], index: 1, kind: input, shape index: {}]
  %s2 = inlined_call_operand.vmem [shape: f32[8,1], index: 2, kind: input, shape index: {}]
  %s3 = inlined_call_operand.vmem [shape: bf16[2,4,18], index: 3, kind: input, shape index: {}]
  %s4 = inlined_call_operand.hbm [shape: f32[2,8,16], index: 4, kind: output, shape index: {}]
  %s5 = sld [smem:[#allocation0]]
  $region49: #{basic_conv2d_forward.3} parent=0
    _
  %s7 = ssub.s32 1, %s5
  %s8 = scalar_select 0, %s7, %s5
  $region1: #{basic_conv2d_forward.3} parent=0
    #allocation2 [shape = 'u8[8192]{0}', space=vmem, size = 0x2000, scoped, tag = 'output window, operand 0']
    #allocation3 [shape = 's32[2]{0}', space=sflag, size = 0x8, scoped, tag = 'scoped memory for basic_conv2d_forward.3']
    %9 = vsyncpa [#allocation3], 0
    %s10 = scalar_lea.sflag [#allocation3], 1
    %11 = vsyncpa %s10, 0
    loop: start=0, step=1, limit=4
    $region2: #{basic_conv2d_forward.3} parent=1 // loop_pre_header
      _
    $region3: #{basic_conv2d_forward.3} parent=1 // loop_header
      %s13 = sphi 0, %s17
      %p14 = scmp.ge.s32.totalorder %s13, 4
      %s20 = sphi 0, %s32
      %s21 = sphi 0, %s28
      %s22 = sphi 0, %s20
      %s23 = sphi 0, %s21
      %s24 = sphi 0, %s22
      %s25 = sphi 0, %s23
      %s35 = sphi 0, %s37
      %s38 = sphi 0, %s35
      %s39 = sphi 0, %s38
      %s55 = sphi 0, %s39
      %s61 = sphi 0, %s63
      %s64 = sphi 0, %s61
      %s65 = sphi 0, %s64
      %s81 = sphi 0, %s65
      %s87 = sphi 0, %s89
      %s90 = sphi 0, %s87
      %s91 = sphi 0, %s90
      %s107 = sphi 0, %s91
      %s113 = sphi 0, %s115
      %s116 = sphi 0, %s113
      %s117 = sphi 0, %s116
      %s133 = sphi 0, %s117
      %s141 = sphi 0, %s143
      %s144 = sphi 0, %s141
      %s145 = sphi 0, %s144
      %s161 = sphi 0, %s145
    $region4: #{basic_conv2d_forward.3} parent=1 // loop_header_branch
      %16 = sbr.rel (%p14) target = $region8
    $region5: #{basic_conv2d_forward.3} parent=1 // loop_body
      %s18 = ssub.s32 %s13, 1
      %s19 = ssub.s32 %s13, 2
      %s26 = sadd.s32 1, %s21
      %p27 = scmp.ge.s32.totalorder %s26, 1
      %s28 = scalar_select %p27, 0, %s26
      %s29 = sadd.s32 1, %s20
      %s30 = scalar_select %p27, %s29, %s20
      %p31 = scmp.ge.s32.totalorder %s30, 2
      %s32 = scalar_select %p31, 0, %s30
      %s33 = ssub.s32 %s21, %s28
      %p34 = scmp.eq.s32.totalorder %s33, 0
      %s36 = sadd.s32 %s35, 1
      %s37 = scalar_select %p34, %s35, %s36
      %p40 = pneg %p34
      %p41 = scmp.eq.s32.totalorder %s13, 1
      %p42 = por %p40, %p41
      %p43 = scmp.ne.s32.totalorder %s35, %s38
      %p44 = scmp.eq.s32.totalorder %s13, 0
      %p45 = por %p43, %p44
      %p46 = scmp.ne.s32.totalorder %s35, %s38
      %p47 = scmp.eq.s32.totalorder %s18, 1
      %p48 = por %p46, %p47
      %p49 = scmp.ne.s32.totalorder %s38, %s39
      %p50 = scmp.eq.s32.totalorder %s18, 0
      %p51 = por %p49, %p50
      %p52 = scmp.ne.s32.totalorder %s38, %s39
      %p53 = scmp.eq.s32.totalorder %s19, 1
      %p54 = por %p52, %p53
      %p56 = scmp.ne.s32.totalorder %s39, %s55
      %p57 = scmp.eq.s32.totalorder %s19, 0
      %p58 = por %p56, %p57
      %s59 = ssub.s32 %s21, %s28
      %p60 = scmp.eq.s32.totalorder %s59, 0
      %s62 = sadd.s32 %s61, 1
      %s63 = scalar_select %p60, %s61, %s62
      %p66 = pneg %p60
      %p67 = scmp.eq.s32.totalorder %s13, 1
      %p68 = por %p66, %p67
      %p69 = scmp.ne.s32.totalorder %s61, %s64
      %p70 = scmp.eq.s32.totalorder %s13, 0
      %p71 = por %p69, %p70
      %p72 = scmp.ne.s32.totalorder %s61, %s64
      %p73 = scmp.eq.s32.totalorder %s18, 1
      %p74 = por %p72, %p73
      %p75 = scmp.ne.s32.totalorder %s64, %s65
      %p76 = scmp.eq.s32.totalorder %s18, 0
      %p77 = por %p75, %p76
      %p78 = scmp.ne.s32.totalorder %s64, %s65
      %p79 = scmp.eq.s32.totalorder %s19, 1
      %p80 = por %p78, %p79
      %p82 = scmp.ne.s32.totalorder %s65, %s81
      %p83 = scmp.eq.s32.totalorder %s19, 0
      %p84 = por %p82, %p83
      %s85 = ssub.s32 %s21, %s28
      %p86 = scmp.eq.s32.totalorder %s85, 0
      %s88 = sadd.s32 %s87, 1
      %s89 = scalar_select %p86, %s87, %s88
      %p92 = pneg %p86
      %p93 = scmp.eq.s32.totalorder %s13, 1
      %p94 = por %p92, %p93
      %p95 = scmp.ne.s32.totalorder %s87, %s90
      %p96 = scmp.eq.s32.totalorder %s13, 0
      %p97 = por %p95, %p96
      %p98 = scmp.ne.s32.totalorder %s87, %s90
      %p99 = scmp.eq.s32.totalorder %s18, 1
      %p100 = por %p98, %p99
      %p101 = scmp.ne.s32.totalorder %s90, %s91
      %p102 = scmp.eq.s32.totalorder %s18, 0
      %p103 = por %p101, %p102
      %p104 = scmp.ne.s32.totalorder %s90, %s91
      %p105 = scmp.eq.s32.totalorder %s19, 1
      %p106 = por %p104, %p105
      %p108 = scmp.ne.s32.totalorder %s91, %s107
      %p109 = scmp.eq.s32.totalorder %s19, 0
      %p110 = por %p108, %p109
      %s111 = ssub.s32 %s20, %s32
      %p112 = scmp.eq.s32.totalorder %s111, 0
      %s114 = sadd.s32 %s113, 1
      %s115 = scalar_select %p112, %s113, %s114
      %p118 = pneg %p112
      %p119 = scmp.eq.s32.totalorder %s13, 1
      %p120 = por %p118, %p119
      %p121 = scmp.ne.s32.totalorder %s113, %s116
      %p122 = scmp.eq.s32.totalorder %s13, 0
      %p123 = por %p121, %p122
      %p124 = scmp.ne.s32.totalorder %s113, %s116
      %p125 = scmp.eq.s32.totalorder %s18, 1
      %p126 = por %p124, %p125
      %p127 = scmp.ne.s32.totalorder %s116, %s117
      %p128 = scmp.eq.s32.totalorder %s18, 0
      %p129 = por %p127, %p128
      %p130 = scmp.ne.s32.totalorder %s116, %s117
      %p131 = scmp.eq.s32.totalorder %s19, 1
      %p132 = por %p130, %p131
      %p134 = scmp.ne.s32.totalorder %s117, %s133
      %p135 = scmp.eq.s32.totalorder %s19, 0
      %p136 = por %p134, %p135
      %s137 = ssub.s32 %s20, %s32
      %s138 = ssub.s32 %s21, %s28
      %s139 = sor.u32 %s137, %s138
      %p140 = scmp.eq.s32.totalorder %s139, 0
      %s142 = sadd.s32 %s141, 1
      %s143 = scalar_select %p140, %s141, %s142
      %p146 = pneg %p140
      %p147 = scmp.eq.s32.totalorder %s13, 1
      %p148 = por %p146, %p147
      %p149 = scmp.ne.s32.totalorder %s141, %s144
      %p150 = scmp.eq.s32.totalorder %s13, 0
      %p151 = por %p149, %p150
      %p152 = scmp.ne.s32.totalorder %s141, %s144
      %p153 = scmp.eq.s32.totalorder %s18, 1
      %p154 = por %p152, %p153
      %p155 = scmp.ne.s32.totalorder %s144, %s145
      %p156 = scmp.eq.s32.totalorder %s18, 0
      %p157 = por %p155, %p156
      %p158 = scmp.ne.s32.totalorder %s144, %s145
      %p159 = scmp.eq.s32.totalorder %s19, 1
      %p160 = por %p158, %p159
      %p162 = scmp.ne.s32.totalorder %s145, %s161
      %p163 = scmp.eq.s32.totalorder %s19, 0
      %p164 = por %p162, %p163
      %p165 = scmp.le.s32.totalorder 1, %s13
      %p166 = scmp.lt.s32.totalorder %s13, 3
      %p167 = pnand %p165, %p166
      %p168 = pneg %p167
      // Predicated region
      $region9: #{basic_conv2d_forward.3} parent=5 // pred_check
        _
      $region10: #{basic_conv2d_forward.3} parent=5 // pred_check_branch
        %170 = sbr.rel (%p167) target = $region12
      $region11: #{basic_conv2d_forward.3} parent=5 // pred_region
        %s171 = ssub.s32 %s13, 1
        // Predicated region
        $region13: #{basic_conv2d_forward.3} parent=11 // pred_check
          %p172 = pneg %p51
        $region14: #{basic_conv2d_forward.3} parent=11 // pred_check_branch
          %174 = sbr.rel (%p172) target = $region16
        $region15: #{basic_conv2d_forward.3} parent=11 // pred_region
          %p175 = scmp.lt.s32.totalorder %s23, 0
          %s176 = scalar_select %p175, %s23, 0
          %s177 = smul.addr %s176, 4
          %s178 = scalar_lea.vmem %s0, %s177
        $region16: #{basic_conv2d_forward.3} parent=11 // pred_fallthru
          _
        // Predicated region
        $region17: #{basic_conv2d_forward.3} parent=11 // pred_check
          %p179 = pneg %p77
        $region18: #{basic_conv2d_forward.3} parent=11 // pred_check_branch
          %181 = sbr.rel (%p179) target = $region20
        $region19: #{basic_conv2d_forward.3} parent=11 // pred_region
          %p182 = scmp.lt.s32.totalorder %s23, 0
          %s183 = scalar_select %p182, %s23, 0
          %s184 = smul.addr %s183, 8
          %s185 = scalar_lea.vmem %s1, %s184
        $region20: #{basic_conv2d_forward.3} parent=11 // pred_fallthru
          _
        // Predicated region
        $region21: #{basic_conv2d_forward.3} parent=11 // pred_check
          %p186 = pneg %p103
        $region22: #{basic_conv2d_forward.3} parent=11 // pred_check_branch
          %188 = sbr.rel (%p186) target = $region24
        $region23: #{basic_conv2d_forward.3} parent=11 // pred_region
          %p189 = scmp.lt.s32.totalorder %s23, 0
          %s190 = scalar_select %p189, %s23, 0
          %s191 = smul.addr %s190, 8
          %s192 = scalar_lea.vmem %s2, %s191
        $region24: #{basic_conv2d_forward.3} parent=11 // pred_fallthru
          _
      $region12: #{basic_conv2d_forward.3} parent=5 // pred_fallthru
        _
      %p193 = scmp.lt.s32.totalorder %s13, 2
      // Predicated region
      $region25: #{basic_conv2d_forward.3} parent=5 // pred_check
        %p194 = pneg %p193
      $region26: #{basic_conv2d_forward.3} parent=5 // pred_check_branch
        %196 = sbr.rel (%p194) target = $region28
      $region27: #{basic_conv2d_forward.3} parent=5 // pred_region
        // Predicated region
        $region29: #{basic_conv2d_forward.3} parent=27 // pred_check
          %p197 = pneg %p123
        $region30: #{basic_conv2d_forward.3} parent=27 // pred_check_branch
          %199 = sbr.rel (%p197) target = $region32
        $region31: #{basic_conv2d_forward.3} parent=27 // pred_region
          %p200 = scmp.lt.s32.totalorder %s20, 1
          %s201 = scalar_select %p200, %s20, 1
          %s202 = smul.addr %s201, 2
          %s203 = scalar_lea.vmem %s3, %s202
        $region32: #{basic_conv2d_forward.3} parent=27 // pred_fallthru
          _
      $region28: #{basic_conv2d_forward.3} parent=5 // pred_fallthru
        _
      %p204 = scmp.le.s32.totalorder 1, %s13
      %p205 = scmp.lt.s32.totalorder %s13, 3
      %p206 = pnand %p204, %p205
      %p207 = pneg %p206
      // Predicated region
      $region33: #{basic_conv2d_forward.3} parent=5 // pred_check
        _
      $region34: #{basic_conv2d_forward.3} parent=5 // pred_check_branch
        %209 = sbr.rel (%p206) target = $region36
      $region35: #{basic_conv2d_forward.3} parent=5 // pred_region
        %s210 = ssub.s32 %s13, 1
        %p211 = scmp.lt.s32.totalorder %s23, 0
        %s212 = scalar_select %p211, %s23, 0
        %s213 = smul.addr %s212, 4
        %s214 = scalar_lea.vmem %s0, %s213
        %p215 = pneg %p51
        %p216 = pneg %p48
        %p217 = scmp.lt.s32.totalorder %s23, 0
        %s218 = scalar_select %p217, %s23, 0
        %s219 = smul.addr %s218, 8
        %s220 = scalar_lea.vmem %s1, %s219
        %p221 = pneg %p77
        %p222 = pneg %p74
        %p223 = scmp.lt.s32.totalorder %s23, 0
        %s224 = scalar_select %p223, %s23, 0
        %s225 = smul.addr %s224, 8
        %s226 = scalar_lea.vmem %s2, %s225
        %p227 = pneg %p103
        %p228 = pneg %p100
        %p229 = scmp.lt.s32.totalorder %s22, 1
        %s230 = scalar_select %p229, %s22, 1
        %s231 = smul.addr %s230, 2
        %s232 = scalar_lea.vmem %s3, %s231
        %p233 = pneg %p129
        %p234 = pneg %p126
        %p235 = pneg %p157
        %p236 = pneg %p154
        %s237 = sand.u32 %s144, 1
        %s238 = scalar_lea.sflag [#allocation3], %s237
        %s239 = sand.u32 %s144, 1
        %s240 = smul.addr %s239, 8
        %s241 = scalar_lea.vmem [#allocation2], %s240
        %p242 = scmp.lt.s32.totalorder %s23, 0
        %s243 = scalar_select %p242, %s23, 0
        %s244 = smul.addr %s243, 4
        %s245 = scalar_lea.vmem %s0, %s244
        %p246 = scmp.lt.s32.totalorder %s23, 0
        %s247 = scalar_select %p246, %s23, 0
        %s248 = smul.addr %s247, 8
        %s249 = scalar_lea.vmem %s1, %s248
        %p250 = scmp.lt.s32.totalorder %s23, 0
        %s251 = scalar_select %p250, %s23, 0
        %s252 = smul.addr %s251, 8
        %s253 = scalar_lea.vmem %s2, %s252
        %p254 = scmp.lt.s32.totalorder %s22, 1
        %s255 = scalar_select %p254, %s22, 1
        %s256 = smul.addr %s255, 2
        %s257 = scalar_lea.vmem %s3, %s256
        %v259 = vld [vmem:[%s257] sm:$0x3]
        %v260 = vld [vmem:[%s245] sm:$0xf]
        %s261 = scalar_lea.vmem %s245, 4
        %v262 = vld [vmem:[%s261] sm:$0xf]
        %264 = vst [vmem:[#allocation1] ss:$4 sm:$0xff] %v259
        %v265 = vld.sshfl [vmem:[#allocation1] sm:$0xff pattern:$0x73625140]
        %267 = vrot.lane.b32.xlu0 %v265, 127
        %v268 = vpop.permute.xlu0 %267
        %vm269 = vcmask 31744
        %v271 = vsel %vm269, %v262, 0
        %vm273 = vcmask 1041408
        %v275 = vsel %vm273, %v268, 0
        %277 = vmatpush.bf16.msra.mxu0 0
        %278 = vmatpush.bf16.msra.mxu0 0
        %279 = vmatpush.bf16.msra.mxu0 0
        %280 = vmatpush.bf16.msra.mxu0 0
        %281 = vmatpush.bf16.msra.mxu0 0
        %282 = vmatpush.bf16.msra.mxu0 0
        %283 = vmatpush.bf16.msra.mxu0 0
        %284 = vmatpush.bf16.msra.mxu0 %v275
        %285 = vmatmul.bf16.gmra.mxu0 %v271
        %v286 = vpop.f32.mrf.mxu0
        %v287 = vadd.f32 0.0, %v286
        %v288 = vpop.f32.mrf.mxu0
        %289 = vdwg.mxu0
        %v291 = vsel %vm269, %v260, 0
        %v293 = vsel %vm273, %v259, 0
        %295 = vmatpush.bf16.msra.mxu0 0
        %296 = vmatpush.bf16.msra.mxu0 0
        %297 = vmatpush.bf16.msra.mxu0 0
        %298 = vmatpush.bf16.msra.mxu0 0
        %299 = vmatpush.bf16.msra.mxu0 0
        %300 = vmatpush.bf16.msra.mxu0 0
        %301 = vmatpush.bf16.msra.mxu0 0
        %302 = vmatpush.bf16.msra.mxu0 %v293
        %303 = vmatmul.bf16.gmra.mxu0 %v291
        %v304 = vpop.f32.mrf.mxu0
        %v305 = vadd.f32 %v287, %v304
        %v306 = vpop.f32.mrf.mxu0
        %307 = vdwg.mxu0
        %s308 = scalar_lea.vmem %s245, 8
        %v309 = vld [vmem:[%s308] sm:$0xf]
        %310 = vst [vmem:[#allocation1] ss:$4 sm:$0xff] %v259
        %v311 = vld.sshfl [vmem:[#allocation1] sm:$0xff pattern:$0x73625140]
        %313 = vrot.lane.b32.xlu0 %v311, 126
        %v314 = vpop.permute.xlu0 %313
        %v316 = vsel %vm269, %v309, 0
        %v319 = vsel %vm273, %v314, 0
        %321 = vmatpush.bf16.msra.mxu0 0
        %322 = vmatpush.bf16.msra.mxu0 0
        %323 = vmatpush.bf16.msra.mxu0 0
        %324 = vmatpush.bf16.msra.mxu0 0
        %325 = vmatpush.bf16.msra.mxu0 0
        %326 = vmatpush.bf16.msra.mxu0 0
        %327 = vmatpush.bf16.msra.mxu0 0
        %328 = vmatpush.bf16.msra.mxu0 %v319
        %329 = vmatmul.bf16.gmra.mxu0 %v316
        %v330 = vpop.f32.mrf.mxu0
        %v331 = vadd.f32 0.0, %v330
        %v332 = vpop.f32.mrf.mxu0
        %333 = vdwg.mxu0
        %v334 = vadd.f32 %v305, %v331
        %v335 = vld [vmem:[%s249] sm:$0xff]
        %337 = vset.pattern.permute.xlu0 0
        %338 = vperm.xlu0 %337, %v335
        %v339 = vpop.permute.xlu0 %338
        %v341 = vmul.f32 %v334, %v339
        %v342 = vld [vmem:[%s253] sm:$0xff]
        %344 = vset.pattern.permute.xlu0 0
        %345 = vperm.xlu0 %344, %v342
        %v346 = vpop.permute.xlu0 %345
        %v348 = vadd.f32 %v341, %v346
        %v349 = vmax.f32 %v348, 0.0
        %vm350 = vcmask 130048
        %351 = vst.msk [vmem:[%s241] sm:$0xff] %vm350, %v349
        %s352 = sand.u32 %s144, 1
        %s353 = scalar_lea.sflag [#allocation3], %s352
        %s354 = sand.u32 %s144, 1
        %s355 = smul.addr %s354, 8
        %s356 = scalar_lea.vmem [#allocation2], %s355
        // Predicated region
        $region37: #{basic_conv2d_forward.3} parent=35 // pred_check
          %p357 = pneg %p154
        $region38: #{basic_conv2d_forward.3} parent=35 // pred_check_branch
          %359 = sbr.rel (%p357) target = $region40
        $region39: #{basic_conv2d_forward.3} parent=35 // pred_region
          %361 = vsyncadd %s353, 0
          %s362 = sadd.s32 %s23, %s22
          %s363 = smul.addr %s362, 8
          %s364 = scalar_lea.hbm %s4, %s363
          %s366 = sshll.u32 %s356, 4
          %s367 = int_to_ptr.vmem [resolvable:$true] %s366
          %s368 = sshll.u32 %s364, 4
          %s369 = int_to_ptr.hbm [resolvable:$true] %s368
          %371 = dma.vmem_to_hbm [thread:$0]  %s367, 128, %s369, %s353
        $region40: #{basic_conv2d_forward.3} parent=35 // pred_fallthru
          _
      $region36: #{basic_conv2d_forward.3} parent=5 // pred_fallthru
        _
      %p372 = scmp.le.s32.totalorder 2, %s13
      // Predicated region
      $region41: #{basic_conv2d_forward.3} parent=5 // pred_check
        %p373 = pneg %p372
      $region42: #{basic_conv2d_forward.3} parent=5 // pred_check_branch
        %375 = sbr.rel (%p373) target = $region44
      $region43: #{basic_conv2d_forward.3} parent=5 // pred_region
        %s376 = ssub.s32 %s13, 2
        // Predicated region
        $region45: #{basic_conv2d_forward.3} parent=43 // pred_check
          %p377 = pneg %p160
        $region46: #{basic_conv2d_forward.3} parent=43 // pred_check_branch
          %379 = sbr.rel (%p377) target = $region48
        $region47: #{basic_conv2d_forward.3} parent=43 // pred_region
          %s380 = sand.u32 %s145, 1
          %s381 = scalar_lea.sflag [#allocation3], %s380
          %s382 = sand.u32 %s145, 1
          %s383 = smul.addr %s382, 8
          %s384 = scalar_lea.vmem [#allocation2], %s383
          %386 = dma.done %s381, 128
        $region48: #{basic_conv2d_forward.3} parent=43 // pred_fallthru
          _
      $region44: #{basic_conv2d_forward.3} parent=5 // pred_fallthru
        _
    $region6: #{basic_conv2d_forward.3} parent=1 // loop_footer
      %s17 = sadd.s32 1, %s13
    $region7: #{basic_conv2d_forward.3} parent=1 // loop_footer_branch
      %12 = sbr.rel target = $region3
    $region8: #{basic_conv2d_forward.3} parent=1 // loop_exit
      _
    %387 = vsyncpa [#allocation3], 1
    %s388 = scalar_lea.sflag [#allocation3], 1
    %389 = vsyncpa %s388, 1

// kernel: basic_conv2d_forward.2
$region0: #{basic_conv2d_forward.2}
  #allocation0 [shape = 'u32[]', space=smem, size = 0x4, offset = 0x4, fixed_abs, tag = 'smem constant byte address 0x4 - core index']
  #allocation1 [shape = 'u32[72,128]{1,0:T(1,128)}', space=vmem, size = 0x9000, scoped, tag = 'internal scratch']
  %s0 = inlined_call_operand.vmem [shape: bf16[3,8,4], index: 0, kind: input, shape index: {}]
  %s1 = inlined_call_operand.vmem [shape: bf16[2,4,18], index: 1, kind: input, shape index: {}]
  %s2 = inlined_call_operand.vmem [shape: f32[2,8,2], index: 2, kind: output, shape index: {}]
  %s3 = sld [smem:[#allocation0]]
  $region41: #{basic_conv2d_forward.2} parent=0
    _
  %s5 = ssub.s32 1, %s3
  %s6 = scalar_select 0, %s5, %s3
  loop: start=0, step=1, limit=4
  $region2: #{basic_conv2d_forward.2} parent=0 // loop_pre_header
    _
  $region3: #{basic_conv2d_forward.2} parent=0 // loop_header
    %s8 = sphi 0, %s12
    %p9 = scmp.ge.s32.totalorder %s8, 4
    %s15 = sphi 0, %s27
    %s16 = sphi 0, %s23
    %s17 = sphi 0, %s15
    %s18 = sphi 0, %s16
    %s19 = sphi 0, %s17
    %s20 = sphi 0, %s18
    %s30 = sphi 0, %s32
    %s33 = sphi 0, %s30
    %s34 = sphi 0, %s33
    %s50 = sphi 0, %s34
    %s56 = sphi 0, %s58
    %s59 = sphi 0, %s56
    %s60 = sphi 0, %s59
    %s76 = sphi 0, %s60
    %s84 = sphi 0, %s86
    %s87 = sphi 0, %s84
    %s88 = sphi 0, %s87
    %s104 = sphi 0, %s88
  $region4: #{basic_conv2d_forward.2} parent=0 // loop_header_branch
    %11 = sbr.rel (%p9) target = $region8
  $region5: #{basic_conv2d_forward.2} parent=0 // loop_body
    %s13 = ssub.s32 %s8, 1
    %s14 = ssub.s32 %s8, 2
    %s21 = sadd.s32 1, %s16
    %p22 = scmp.ge.s32.totalorder %s21, 1
    %s23 = scalar_select %p22, 0, %s21
    %s24 = sadd.s32 1, %s15
    %s25 = scalar_select %p22, %s24, %s15
    %p26 = scmp.ge.s32.totalorder %s25, 2
    %s27 = scalar_select %p26, 0, %s25
    %s28 = ssub.s32 %s16, %s23
    %p29 = scmp.eq.s32.totalorder %s28, 0
    %s31 = sadd.s32 %s30, 1
    %s32 = scalar_select %p29, %s30, %s31
    %p35 = pneg %p29
    %p36 = scmp.eq.s32.totalorder %s8, 1
    %p37 = por %p35, %p36
    %p38 = scmp.ne.s32.totalorder %s30, %s33
    %p39 = scmp.eq.s32.totalorder %s8, 0
    %p40 = por %p38, %p39
    %p41 = scmp.ne.s32.totalorder %s30, %s33
    %p42 = scmp.eq.s32.totalorder %s13, 1
    %p43 = por %p41, %p42
    %p44 = scmp.ne.s32.totalorder %s33, %s34
    %p45 = scmp.eq.s32.totalorder %s13, 0
    %p46 = por %p44, %p45
    %p47 = scmp.ne.s32.totalorder %s33, %s34
    %p48 = scmp.eq.s32.totalorder %s14, 1
    %p49 = por %p47, %p48
    %p51 = scmp.ne.s32.totalorder %s34, %s50
    %p52 = scmp.eq.s32.totalorder %s14, 0
    %p53 = por %p51, %p52
    %s54 = ssub.s32 %s15, %s27
    %p55 = scmp.eq.s32.totalorder %s54, 0
    %s57 = sadd.s32 %s56, 1
    %s58 = scalar_select %p55, %s56, %s57
    %p61 = pneg %p55
    %p62 = scmp.eq.s32.totalorder %s8, 1
    %p63 = por %p61, %p62
    %p64 = scmp.ne.s32.totalorder %s56, %s59
    %p65 = scmp.eq.s32.totalorder %s8, 0
    %p66 = por %p64, %p65
    %p67 = scmp.ne.s32.totalorder %s56, %s59
    %p68 = scmp.eq.s32.totalorder %s13, 1
    %p69 = por %p67, %p68
    %p70 = scmp.ne.s32.totalorder %s59, %s60
    %p71 = scmp.eq.s32.totalorder %s13, 0
    %p72 = por %p70, %p71
    %p73 = scmp.ne.s32.totalorder %s59, %s60
    %p74 = scmp.eq.s32.totalorder %s14, 1
    %p75 = por %p73, %p74
    %p77 = scmp.ne.s32.totalorder %s60, %s76
    %p78 = scmp.eq.s32.totalorder %s14, 0
    %p79 = por %p77, %p78
    %s80 = ssub.s32 %s15, %s27
    %s81 = ssub.s32 %s16, %s23
    %s82 = sor.u32 %s80, %s81
    %p83 = scmp.eq.s32.totalorder %s82, 0
    %s85 = sadd.s32 %s84, 1
    %s86 = scalar_select %p83, %s84, %s85
    %p89 = pneg %p83
    %p90 = scmp.eq.s32.totalorder %s8, 1
    %p91 = por %p89, %p90
    %p92 = scmp.ne.s32.totalorder %s84, %s87
    %p93 = scmp.eq.s32.totalorder %s8, 0
    %p94 = por %p92, %p93
    %p95 = scmp.ne.s32.totalorder %s84, %s87
    %p96 = scmp.eq.s32.totalorder %s13, 1
    %p97 = por %p95, %p96
    %p98 = scmp.ne.s32.totalorder %s87, %s88
    %p99 = scmp.eq.s32.totalorder %s13, 0
    %p100 = por %p98, %p99
    %p101 = scmp.ne.s32.totalorder %s87, %s88
    %p102 = scmp.eq.s32.totalorder %s14, 1
    %p103 = por %p101, %p102
    %p105 = scmp.ne.s32.totalorder %s88, %s104
    %p106 = scmp.eq.s32.totalorder %s14, 0
    %p107 = por %p105, %p106
    %p108 = scmp.le.s32.totalorder 1, %s8
    %p109 = scmp.lt.s32.totalorder %s8, 3
    %p110 = pnand %p108, %p109
    %p111 = pneg %p110
    // Predicated region
    $region9: #{basic_conv2d_forward.2} parent=5 // pred_check
      _
    $region10: #{basic_conv2d_forward.2} parent=5 // pred_check_branch
      %113 = sbr.rel (%p110) target = $region12
    $region11: #{basic_conv2d_forward.2} parent=5 // pred_region
      %s114 = ssub.s32 %s8, 1
      // Predicated region
      $region13: #{basic_conv2d_forward.2} parent=11 // pred_check
        %p115 = pneg %p46
      $region14: #{basic_conv2d_forward.2} parent=11 // pred_check_branch
        %117 = sbr.rel (%p115) target = $region16
      $region15: #{basic_conv2d_forward.2} parent=11 // pred_region
        %p118 = scmp.lt.s32.totalorder %s18, 0
        %s119 = scalar_select %p118, %s18, 0
        %s120 = smul.addr %s119, 4
        %s121 = scalar_lea.vmem %s0, %s120
      $region16: #{basic_conv2d_forward.2} parent=11 // pred_fallthru
        _
    $region12: #{basic_conv2d_forward.2} parent=5 // pred_fallthru
      _
    %p122 = scmp.lt.s32.totalorder %s8, 2
    // Predicated region
    $region17: #{basic_conv2d_forward.2} parent=5 // pred_check
      %p123 = pneg %p122
    $region18: #{basic_conv2d_forward.2} parent=5 // pred_check_branch
      %125 = sbr.rel (%p123) target = $region20
    $region19: #{basic_conv2d_forward.2} parent=5 // pred_region
      // Predicated region
      $region21: #{basic_conv2d_forward.2} parent=19 // pred_check
        %p126 = pneg %p66
      $region22: #{basic_conv2d_forward.2} parent=19 // pred_check_branch
        %128 = sbr.rel (%p126) target = $region24
      $region23: #{basic_conv2d_forward.2} parent=19 // pred_region
        %p129 = scmp.lt.s32.totalorder %s15, 1
        %s130 = scalar_select %p129, %s15, 1
        %s131 = smul.addr %s130, 2
        %s132 = scalar_lea.vmem %s1, %s131
      $region24: #{basic_conv2d_forward.2} parent=19 // pred_fallthru
        _
    $region20: #{basic_conv2d_forward.2} parent=5 // pred_fallthru
      _
    %p133 = scmp.le.s32.totalorder 1, %s8
    %p134 = scmp.lt.s32.totalorder %s8, 3
    %p135 = pnand %p133, %p134
    %p136 = pneg %p135
    // Predicated region
    $region25: #{basic_conv2d_forward.2} parent=5 // pred_check
      _
    $region26: #{basic_conv2d_forward.2} parent=5 // pred_check_branch
      %138 = sbr.rel (%p135) target = $region28
    $region27: #{basic_conv2d_forward.2} parent=5 // pred_region
      %s139 = ssub.s32 %s8, 1
      %p140 = scmp.lt.s32.totalorder %s18, 0
      %s141 = scalar_select %p140, %s18, 0
      %s142 = smul.addr %s141, 4
      %s143 = scalar_lea.vmem %s0, %s142
      %p144 = pneg %p46
      %p145 = pneg %p43
      %p146 = scmp.lt.s32.totalorder %s17, 1
      %s147 = scalar_select %p146, %s17, 1
      %s148 = smul.addr %s147, 2
      %s149 = scalar_lea.vmem %s1, %s148
      %p150 = pneg %p72
      %p151 = pneg %p69
      %p152 = pneg %p100
      %p153 = pneg %p97
      %p154 = scmp.lt.s32.totalorder %s17, 1
      %s155 = scalar_select %p154, %s17, 1
      %p156 = scmp.lt.s32.totalorder %s18, 0
      %s157 = scalar_select %p156, %s18, 0
      %s158 = sadd.s32 %s157, %s155
      %s159 = smul.addr %s158, 8
      %s160 = scalar_lea.vmem %s2, %s159
      %p161 = scmp.lt.s32.totalorder %s18, 0
      %s162 = scalar_select %p161, %s18, 0
      %s163 = smul.addr %s162, 4
      %s164 = scalar_lea.vmem %s0, %s163
      %p165 = scmp.lt.s32.totalorder %s17, 1
      %s166 = scalar_select %p165, %s17, 1
      %s167 = smul.addr %s166, 2
      %s168 = scalar_lea.vmem %s1, %s167
      %p169 = scmp.lt.s32.totalorder %s17, 1
      %s170 = scalar_select %p169, %s17, 1
      %p171 = scmp.lt.s32.totalorder %s18, 0
      %s172 = scalar_select %p171, %s18, 0
      %s173 = sadd.s32 %s172, %s170
      %s174 = smul.addr %s173, 8
      %s175 = scalar_lea.vmem %s2, %s174
      %v177 = vld [vmem:[%s168] sm:$0x3]
      %v178 = vld [vmem:[%s164] sm:$0xf]
      %s179 = scalar_lea.vmem %s164, 4
      %v180 = vld [vmem:[%s179] sm:$0xf]
      %182 = vst [vmem:[#allocation1] ss:$4 sm:$0xff] %v177
      %v183 = vld.sshfl [vmem:[#allocation1] sm:$0xff pattern:$0x73625140]
      %185 = vrot.lane.b32.xlu0 %v183, 127
      %v186 = vpop.permute.xlu0 %185
      %vm187 = vcmask 31744
      %v189 = vsel %vm187, %v180, 0
      %vm191 = vcmask 1041408
      %v193 = vsel %vm191, %v186, 0
      %195 = vmatpush.bf16.msra.mxu0 0
      %196 = vmatpush.bf16.msra.mxu0 0
      %197 = vmatpush.bf16.msra.mxu0 0
      %198 = vmatpush.bf16.msra.mxu0 0
      %199 = vmatpush.bf16.msra.mxu0 0
      %200 = vmatpush.bf16.msra.mxu0 0
      %201 = vmatpush.bf16.msra.mxu0 0
      %202 = vmatpush.bf16.msra.mxu0 %v193
      %203 = vmatmul.bf16.gmra.mxu0 %v189
      %v204 = vpop.f32.mrf.mxu0
      %v205 = vadd.f32 0.0, %v204
      %v206 = vpop.f32.mrf.mxu0
      %207 = vdwg.mxu0
      %v209 = vsel %vm187, %v178, 0
      %v211 = vsel %vm191, %v177, 0
      %213 = vmatpush.bf16.msra.mxu0 0
      %214 = vmatpush.bf16.msra.mxu0 0
      %215 = vmatpush.bf16.msra.mxu0 0
      %216 = vmatpush.bf16.msra.mxu0 0
      %217 = vmatpush.bf16.msra.mxu0 0
      %218 = vmatpush.bf16.msra.mxu0 0
      %219 = vmatpush.bf16.msra.mxu0 0
      %220 = vmatpush.bf16.msra.mxu0 %v211
      %221 = vmatmul.bf16.gmra.mxu0 %v209
      %v222 = vpop.f32.mrf.mxu0
      %v223 = vadd.f32 %v205, %v222
      %v224 = vpop.f32.mrf.mxu0
      %225 = vdwg.mxu0
      %s226 = scalar_lea.vmem %s164, 8
      %v227 = vld [vmem:[%s226] sm:$0xf]
      %228 = vst [vmem:[#allocation1] ss:$4 sm:$0xff] %v177
      %v229 = vld.sshfl [vmem:[#allocation1] sm:$0xff pattern:$0x73625140]
      %231 = vrot.lane.b32.xlu0 %v229, 126
      %v232 = vpop.permute.xlu0 %231
      %v234 = vsel %vm187, %v227, 0
      %v237 = vsel %vm191, %v232, 0
      %239 = vmatpush.bf16.msra.mxu0 0
      %240 = vmatpush.bf16.msra.mxu0 0
      %241 = vmatpush.bf16.msra.mxu0 0
      %242 = vmatpush.bf16.msra.mxu0 0
      %243 = vmatpush.bf16.msra.mxu0 0
      %244 = vmatpush.bf16.msra.mxu0 0
      %245 = vmatpush.bf16.msra.mxu0 0
      %246 = vmatpush.bf16.msra.mxu0 %v237
      %247 = vmatmul.bf16.gmra.mxu0 %v234
      %v248 = vpop.f32.mrf.mxu0
      %v249 = vadd.f32 0.0, %v248
      %v250 = vpop.f32.mrf.mxu0
      %251 = vdwg.mxu0
      %v252 = vadd.f32 %v223, %v249
      %vm253 = vcmask 130048
      %v254 = vsel %vm253, %v252, 0.0
      %255 = vadd.xlane.f32.xlu0 %v254
      %v256 = vpop.xlane.xlu0 %255
      %v257 = vmul.f32 %v256, 0.0625
      %v258 = vsub.f32 %v252, %v257
      %v259 = vmul.f32 %v258, %v258
      %v260 = vsel %vm253, %v259, 0.0
      %261 = vadd.xlane.f32.xlu0 %v260
      %v262 = vpop.xlane.xlu0 %261
      %vm263 = vcmask 7168
      %v264 = vsel %vm263, %v256, %v262
      %vm265 = vcmask 15360
      %266 = vst.msk [vmem:[%s175] sm:$0xff] %vm265, %v264
      %p267 = scmp.lt.s32.totalorder %s17, 1
      %s268 = scalar_select %p267, %s17, 1
      %p269 = scmp.lt.s32.totalorder %s18, 0
      %s270 = scalar_select %p269, %s18, 0
      %s271 = sadd.s32 %s270, %s268
      %s272 = smul.addr %s271, 8
      %s273 = scalar_lea.vmem %s2, %s272
      // Predicated region
      $region29: #{basic_conv2d_forward.2} parent=27 // pred_check
        %p274 = pneg %p97
      $region30: #{basic_conv2d_forward.2} parent=27 // pred_check_branch
        %276 = sbr.rel (%p274) target = $region32
      $region31: #{basic_conv2d_forward.2} parent=27 // pred_region
        _
      $region32: #{basic_conv2d_forward.2} parent=27 // pred_fallthru
        _
    $region28: #{basic_conv2d_forward.2} parent=5 // pred_fallthru
      _
    %p277 = scmp.le.s32.totalorder 2, %s8
    // Predicated region
    $region33: #{basic_conv2d_forward.2} parent=5 // pred_check
      %p278 = pneg %p277
    $region34: #{basic_conv2d_forward.2} parent=5 // pred_check_branch
      %280 = sbr.rel (%p278) target = $region36
    $region35: #{basic_conv2d_forward.2} parent=5 // pred_region
      %s281 = ssub.s32 %s8, 2
      // Predicated region
      $region37: #{basic_conv2d_forward.2} parent=35 // pred_check
        %p282 = pneg %p103
      $region38: #{basic_conv2d_forward.2} parent=35 // pred_check_branch
        %284 = sbr.rel (%p282) target = $region40
      $region39: #{basic_conv2d_forward.2} parent=35 // pred_region
        %p285 = scmp.lt.s32.totalorder %s19, 1
        %s286 = scalar_select %p285, %s19, 1
        %p287 = scmp.lt.s32.totalorder %s20, 0
        %s288 = scalar_select %p287, %s20, 0
        %s289 = sadd.s32 %s288, %s286
        %s290 = smul.addr %s289, 8
        %s291 = scalar_lea.vmem %s2, %s290
      $region40: #{basic_conv2d_forward.2} parent=35 // pred_fallthru
        _
    $region36: #{basic_conv2d_forward.2} parent=5 // pred_fallthru
      _
  $region6: #{basic_conv2d_forward.2} parent=0 // loop_footer
    %s12 = sadd.s32 1, %s8
  $region7: #{basic_conv2d_forward.2} parent=0 // loop_footer_branch
    %7 = sbr.rel target = $region3
  $region8: #{basic_conv2d_forward.2} parent=0 // loop_exit
    _

</llo_original>
